<compile_context>
chip_gen: v7x
topology: tpu7x:2x2x1
jax: 0.10.0
libtpu: 0.0.40
codegen_flags: <defaults>
</compile_context>

<pallas_src>
import jax
import jax.numpy as jnp
from jax.experimental import pallas as pl
from jax.experimental.pallas import tpu as pltpu


# ~2 MiB per operand block: 5 operands x 2 buffers = <= 20 MiB of VMEM,
# sized so it is safe on v7x (64 MiB VMEM per TC) as well as v5e/v6e.
_TARGET_BLOCK_BYTES = 2 * 1024 * 1024
_VMEM_LIMIT_BYTES = 48 * 1024 * 1024


def _decomp_kernel(u_ref, dev_ref, part_ref, o_ref):
    """Elementwise hot path: out = u * sigmoid(dev * part)."""
    z = dev_ref[...] * part_ref[...]
    # sigmoid(x) = 1 / (1 + exp(-x)); exp runs on the EUP. Exact reciprocal is
    # kept (mem-bound kernel, VALU divide is free) to preserve 1e-6 tolerance.
    sig = 1.0 / (1.0 + jnp.exp(-z))
    o_ref[...] = u_ref[...] * sig


def _decomp_kernel_zero(u_ref, hm_ref, ms_ref, wr_ref, fa_ref, o_ref):
    """Zero branch, fused: out = u * sigmoid(((HM70A+miniSONO)/2) * ((wrist+forearm)/2))."""
    dev = (hm_ref[...] + ms_ref[...]) * 0.5
    part = (wr_ref[...] + fa_ref[...]) * 0.5
    z = dev * part
    sig = 1.0 / (1.0 + jnp.exp(-z))
    o_ref[...] = u_ref[...] * sig


def _choose_layout(total):
    """Pick a lane-dense (R, C) factorization of the flattened array.

    Returns (R, C, padded_total); padded_total > total only when `total` is
    not a multiple of 128 (then the flat arrays are zero-padded).
    """
    for c in (4096, 2048, 1024, 512, 256, 128):
        if total % c == 0:
            return total // c, c, total
    # Awkward size: pad to a multiple of one (8, 128) tile.
    c = 128
    padded = -(-total // (8 * c)) * (8 * c)
    return padded // c, c, padded


def _choose_tile_rows(R, C, itemsize):
    """Largest row-tile with block_bytes <= _TARGET_BLOCK_BYTES (multiple of 8)."""
    target_rows = max(1, _TARGET_BLOCK_BYTES // (C * itemsize))
    if target_rows >= R:
        return R  # whole array in one block -> grid=(1,), no pipeline overhead
    return max(8, (target_rows // 8) * 8)


def additive_decomposed_weight_fwd(ultrasonograpy, HM70A, miniSONO, wrist, forearm,
                                   *, device_hm70a=True, part_wrist=True, zero=False):
    """Pallas wrapper reproducing the PyTorch forward exactly.

    All params share one shape. Branch selection mirrors the module's static
    boolean flags; the elementwise compute (including the Zero-branch
    averaging) runs fused inside a single Pallas kernel.
    """
    assert ultrasonograpy.shape == HM70A.shape == miniSONO.shape
    assert ultrasonograpy.shape == wrist.shape == forearm.shape

    orig_shape = ultrasonograpy.shape
    dtype = ultrasonograpy.dtype
    itemsize = jnp.dtype(dtype).itemsize

    total = 1
    for s in orig_shape:
        total *= s

    R, C, padded_total = _choose_layout(total)

    if zero:
        operands = [ultrasonograpy, HM70A, miniSONO, wrist, forearm]
        kernel = _decomp_kernel_zero
    else:
        dev = HM70A if device_hm70a else miniSONO
        part = wrist if part_wrist else forearm
        operands = [ultrasonograpy, dev, part]
        kernel = _decomp_kernel

    def to_2d(x):
        flat = x.reshape(-1)
        if padded_total != total:
            flat = jnp.pad(flat, (0, padded_total - total))
        return flat.reshape(R, C)

    ops2d = [to_2d(x) for x in operands]

    tr = _choose_tile_rows(R, C, itemsize)
    grid = (pl.cdiv(R, tr),)
    spec = pl.BlockSpec((tr, C), lambda i: (i, 0))

    out2 = pl.pallas_call(
        kernel,
        out_shape=jax.ShapeDtypeStruct((R, C), dtype),
        grid_spec=pltpu.PrefetchScalarGridSpec(
            num_scalar_prefetch=0,
            grid=grid,
            in_specs=[spec] * len(ops2d),
            out_specs=spec,
        ),
        compiler_params=pltpu.CompilerParams(
            dimension_semantics=("parallel",),
            vmem_limit_bytes=_VMEM_LIMIT_BYTES,
        ),
    )(*ops2d)

    out_flat = out2.reshape(-1)
    if padded_total != total:
        out_flat = out_flat[:total]
    return out_flat.reshape(orig_shape)


# --- pure-JAX references -----------------------------------------------------

def reference_fwd(u, HM70A, miniSONO, wrist, forearm,
                  *, device_hm70a=True, part_wrist=True, zero=False):
    dev = HM70A if device_hm70a else miniSONO
    part = wrist if part_wrist else forearm
    if zero:
        z = (HM70A + miniSONO) * 0.5 * ((wrist + forearm) * 0.5)
    else:
        z = dev * part
    return u * jax.nn.sigmoid(z)


if __name__ == "__main__":
    key = jax.random.PRNGKey(0)
    scale = 1.0

    # --- 1) module-default init & flags (Device_HM70A=True, Part_wrist=True, Zero=False)
    shape = (4, 16, 128)
    k1, k2 = jax.random.split(key, 2)
    ultrasonograpy = jax.random.normal(k1, shape, dtype=jnp.float32)
    HM70A = scale * jnp.ones(shape, dtype=jnp.float32)
    miniSONO = scale * jnp.ones(shape, dtype=jnp.float32)
    wrist = scale * jnp.ones(shape, dtype=jnp.float32)
    forearm = scale * jnp.ones(shape, dtype=jnp.float32)

    out = additive_decomposed_weight_fwd(ultrasonograpy, HM70A, miniSONO, wrist, forearm)
    out = jax.block_until_ready(out)
    ref = reference_fwd(ultrasonograpy, HM70A, miniSONO, wrist, forearm)
    assert out.shape == shape and out.dtype == jnp.float32
    assert jnp.allclose(out, ref, atol=1e-6, rtol=1e-6), "default-path mismatch"

    # --- 2) Zero=True path, randomized weights (fused averaging in-kernel)
    ks = jax.random.split(k2, 5)
    rnd = [jax.random.normal(ks[i], shape, dtype=jnp.float32) for i in range(5)]
    out_z = additive_decomposed_weight_fwd(*rnd, zero=True)
    out_z = jax.block_until_ready(out_z)
    ref_z = reference_fwd(*rnd, zero=True)
    assert jnp.allclose(out_z, ref_z, atol=1e-6, rtol=1e-6), "zero-path mismatch"

    # --- 3) awkward shape (total not a multiple of 128) exercises the padding path
    shape3 = (3, 5, 7)
    ks3 = jax.random.split(ks[-1], 5)
    rnd3 = [jax.random.normal(ks3[i], shape3, dtype=jnp.float32) for i in range(5)]
    out_a = additive_decomposed_weight_fwd(*rnd3)
    out_a = jax.block_until_ready(out_a)
    ref_a = reference_fwd(*rnd3)
    assert out_a.shape == shape3
    assert jnp.allclose(out_a, ref_a, atol=1e-6, rtol=1e-6), "padded-path mismatch"

    print("KERNEL_OK")
</pallas_src>

<mosaic_0001>
module attributes {stable_mosaic.version = 11 : i64} {
  func.func @_decomp_kernel(%arg0: i32, %arg1: memref<2x4096xf32, #tpu.memory_space<vmem>>, %arg2: memref<2x4096xf32, #tpu.memory_space<vmem>>, %arg3: memref<2x4096xf32, #tpu.memory_space<vmem>>, %arg4: memref<2x4096xf32, #tpu.memory_space<vmem>>) attributes {dimension_semantics = [#tpu.dimension_semantics<parallel>], iteration_bounds = array<i64: 1>, scalar_prefetch = 0 : i64, scratch_operands = 0 : i64, tpu.core_type = #tpu.core_type<tc>, window_params = [{transform_indices = @transform_0, window_bounds = array<i64: 2, 4096>}, {transform_indices = @transform_1, window_bounds = array<i64: 2, 4096>}, {transform_indices = @transform_2, window_bounds = array<i64: 2, 4096>}, {transform_indices = @transform_3, window_bounds = array<i64: 2, 4096>}]} {
    %c0 = arith.constant 0 : index
    %c0_0 = arith.constant 0 : index
    %0 = vector.load %arg2[%c0, %c0_0] : memref<2x4096xf32, #tpu.memory_space<vmem>>, vector<2x4096xf32>
    %c0_1 = arith.constant 0 : index
    %c0_2 = arith.constant 0 : index
    %1 = vector.load %arg3[%c0_1, %c0_2] : memref<2x4096xf32, #tpu.memory_space<vmem>>, vector<2x4096xf32>
    %2 = arith.mulf %0, %1 : vector<2x4096xf32>
    %cst = arith.constant 0.000000e+00 : f32
    %3 = vector.broadcast %cst : f32 to vector<2x4096xf32>
    %4 = arith.subf %3, %2 : vector<2x4096xf32>
    %5 = math.exp %4 : vector<2x4096xf32>
    %cst_3 = arith.constant 1.000000e+00 : f32
    %6 = vector.broadcast %cst_3 : f32 to vector<2x4096xf32>
    %7 = arith.addf %6, %5 : vector<2x4096xf32>
    %cst_4 = arith.constant 1.000000e+00 : f32
    %8 = vector.broadcast %cst_4 : f32 to vector<2x4096xf32>
    %9 = arith.divf %8, %7 : vector<2x4096xf32>
    %c0_5 = arith.constant 0 : index
    %c0_6 = arith.constant 0 : index
    %10 = vector.load %arg1[%c0_5, %c0_6] : memref<2x4096xf32, #tpu.memory_space<vmem>>, vector<2x4096xf32>
    %11 = arith.mulf %10, %9 : vector<2x4096xf32>
    %c0_7 = arith.constant 0 : index
    %c0_8 = arith.constant 0 : index
    %12 = vector.load %arg4[%c0_7, %c0_8] : memref<2x4096xf32, #tpu.memory_space<vmem>>, vector<2x4096xf32>
    tpu.vector_store %arg4[%c0_7, %c0_8], %11 {strides = array<i32>} : memref<2x4096xf32, #tpu.memory_space<vmem>>, vector<2x4096xf32>,
    return
  }
  func.func @transform_0(%arg0: i32) -> (i32, i32) {
    %c0_i32 = arith.constant 0 : i32
    %c0_i32_0 = arith.constant 0 : i32
    return %arg0, %c0_i32 : i32, i32
  }
  func.func @transform_1(%arg0: i32) -> (i32, i32) {
    %c0_i32 = arith.constant 0 : i32
    %c0_i32_0 = arith.constant 0 : i32
    return %arg0, %c0_i32 : i32, i32
  }
  func.func @transform_2(%arg0: i32) -> (i32, i32) {
    %c0_i32 = arith.constant 0 : i32
    %c0_i32_0 = arith.constant 0 : i32
    return %arg0, %c0_i32 : i32, i32
  }
  func.func @transform_3(%arg0: i32) -> (i32, i32) {
    %c0_i32 = arith.constant 0 : i32
    %c0_i32_0 = arith.constant 0 : i32
    return %arg0, %c0_i32 : i32, i32
  }
}

</mosaic_0001>

<llo_original>
// kernel: tpu_custom_call.1
$region0: #{tpu_custom_call.1}
  #allocation0 [shape = 'u32[]', space=smem, size = 0x4, offset = 0x4, fixed_abs, tag = 'smem constant byte address 0x4 - core index']
  #allocation1 [shape = 'u32[144,128]{1,0:T(1,128)}', space=vmem, size = 0x12000, scoped, tag = 'internal scratch']
  %s0 = inlined_call_operand.hbm [shape: f32[2,4096], index: 0, kind: input, shape index: {}]
  %s1 = inlined_call_operand.hbm [shape: f32[2,4096], index: 1, kind: input, shape index: {}]
  %s2 = inlined_call_operand.hbm [shape: f32[2,4096], index: 2, kind: input, shape index: {}]
  %s3 = inlined_call_operand.hbm [shape: f32[2,4096], index: 3, kind: output, shape index: {}]
  %s4 = sld [smem:[#allocation0]]
  $region34: #{tpu_custom_call.1} parent=0
    _
  %s6 = ssub.s32 1, %s4
  %s7 = scalar_select 0, %s6, %s4
  $region1: #{tpu_custom_call.1} parent=0
    #allocation2 [shape = 'u8[32768]{0}', space=vmem, size = 0x8000, scoped, tag = 'input window, operand 0, single buffered']
    #allocation3 [shape = 's32[1]{0}', space=sflag, size = 0x4, scoped, tag = 'scoped memory for tpu_custom_call.1']
    #allocation4 [shape = 's32[1]{0}', space=sflag, size = 0x4, scoped, tag = 'scoped memory for tpu_custom_call.1']
    #allocation5 [shape = 'u8[32768]{0}', space=vmem, size = 0x8000, scoped, tag = 'input window, operand 1, single buffered']
    #allocation6 [shape = 's32[1]{0}', space=sflag, size = 0x4, scoped, tag = 'scoped memory for tpu_custom_call.1']
    #allocation7 [shape = 'u8[32768]{0}', space=vmem, size = 0x8000, scoped, tag = 'input window, operand 2, single buffered']
    #allocation8 [shape = 'u8[32768]{0}', space=vmem, size = 0x8000, scoped, tag = 'output window, operand 0, single buffered']
    %8 = vsyncpa [#allocation3], 0
    %9 = vsyncpa [#allocation6], 0
    %10 = vsyncpa [#allocation4], 0
    // Predicated region
    $region2: #{tpu_custom_call.1} parent=1 // pred_check
      _
    $region3: #{tpu_custom_call.1} parent=1 // pred_check_branch
      %12 = sbr.rel (0) target = $region5
    $region4: #{tpu_custom_call.1} parent=1 // pred_region
      %s14 = ssub.s32 1024, 1024
      %15 = vsyncadd [#allocation3], %s14
      %s17 = sshll.u32 [#allocation2], 4
      %s18 = int_to_ptr.vmem [resolvable:$true] %s17
      %20 = dma.hbm_to_vmem [thread:$0]  %s0, 1024, %s18, [#allocation3]
    $region5: #{tpu_custom_call.1} parent=1 // pred_fallthru
      _
    // Predicated region
    $region6: #{tpu_custom_call.1} parent=1 // pred_check
      _
    $region7: #{tpu_custom_call.1} parent=1 // pred_check_branch
      %22 = sbr.rel (0) target = $region9
    $region8: #{tpu_custom_call.1} parent=1 // pred_region
      %s24 = ssub.s32 1024, 1024
      %25 = vsyncadd [#allocation6], %s24
      %s27 = sshll.u32 [#allocation5], 4
      %s28 = int_to_ptr.vmem [resolvable:$true] %s27
      %30 = dma.hbm_to_vmem [thread:$0]  %s1, 1024, %s28, [#allocation6]
    $region9: #{tpu_custom_call.1} parent=1 // pred_fallthru
      _
    // Predicated region
    $region10: #{tpu_custom_call.1} parent=1 // pred_check
      _
    $region11: #{tpu_custom_call.1} parent=1 // pred_check_branch
      %32 = sbr.rel (0) target = $region13
    $region12: #{tpu_custom_call.1} parent=1 // pred_region
      %s34 = ssub.s32 1024, 1024
      %35 = vsyncadd [#allocation6], %s34
      %s37 = sshll.u32 [#allocation7], 4
      %s38 = int_to_ptr.vmem [resolvable:$true] %s37
      %40 = dma.hbm_to_vmem [thread:$0]  %s2, 1024, %s38, [#allocation6]
    $region13: #{tpu_custom_call.1} parent=1 // pred_fallthru
      _
    // Predicated region
    $region14: #{tpu_custom_call.1} parent=1 // pred_check
      _
    $region15: #{tpu_custom_call.1} parent=1 // pred_check_branch
      %42 = sbr.rel (0) target = $region17
    $region16: #{tpu_custom_call.1} parent=1 // pred_region
      %43 = dma.done [#allocation3], 1024
    $region17: #{tpu_custom_call.1} parent=1 // pred_fallthru
      _
    // Predicated region
    $region18: #{tpu_custom_call.1} parent=1 // pred_check
      _
    $region19: #{tpu_custom_call.1} parent=1 // pred_check_branch
      %45 = sbr.rel (0) target = $region21
    $region20: #{tpu_custom_call.1} parent=1 // pred_region
      %46 = dma.done [#allocation6], 1024
    $region21: #{tpu_custom_call.1} parent=1 // pred_fallthru
      _
    // Predicated region
    $region22: #{tpu_custom_call.1} parent=1 // pred_check
      _
    $region23: #{tpu_custom_call.1} parent=1 // pred_check_branch
      %48 = sbr.rel (0) target = $region25
    $region24: #{tpu_custom_call.1} parent=1 // pred_region
      %49 = dma.done [#allocation6], 1024
    $region25: #{tpu_custom_call.1} parent=1 // pred_fallthru
      _
    %v50 = vld [vmem:[#allocation5] sm:$0xff]
    %v51 = vld [vmem:[#allocation5 + $0x8] sm:$0xff]
    %v52 = vld [vmem:[#allocation5 + $0x10] sm:$0xff]
    %v53 = vld [vmem:[#allocation5 + $0x18] sm:$0xff]
    %v54 = vld [vmem:[#allocation5 + $0x20] sm:$0xff]
    %v55 = vld [vmem:[#allocation5 + $0x28] sm:$0xff]
    %v56 = vld [vmem:[#allocation5 + $0x30] sm:$0xff]
    %v57 = vld [vmem:[#allocation5 + $0x38] sm:$0xff]
    %v58 = vld [vmem:[#allocation7] sm:$0xff]
    %v59 = vld [vmem:[#allocation7 + $0x8] sm:$0xff]
    %v60 = vld [vmem:[#allocation7 + $0x10] sm:$0xff]
    %v61 = vld [vmem:[#allocation7 + $0x18] sm:$0xff]
    %v62 = vld [vmem:[#allocation7 + $0x20] sm:$0xff]
    %v63 = vld [vmem:[#allocation7 + $0x28] sm:$0xff]
    %v64 = vld [vmem:[#allocation7 + $0x30] sm:$0xff]
    %v65 = vld [vmem:[#allocation7 + $0x38] sm:$0xff]
    %v66 = vmul.f32 %v50, %v58
    %v67 = vmul.f32 %v51, %v59
    %v68 = vmul.f32 %v52, %v60
    %v69 = vmul.f32 %v53, %v61
    %v70 = vmul.f32 %v54, %v62
    %v71 = vmul.f32 %v55, %v63
    %v72 = vmul.f32 %v56, %v64
    %v73 = vmul.f32 %v57, %v65
    %v74 = vsub.f32 0.0, %v66
    %v75 = vsub.f32 0.0, %v67
    %v76 = vsub.f32 0.0, %v68
    %v77 = vsub.f32 0.0, %v69
    %v78 = vsub.f32 0.0, %v70
    %v79 = vsub.f32 0.0, %v71
    %v80 = vsub.f32 0.0, %v72
    %v81 = vsub.f32 0.0, %v73
    %v82 = vmul.f32 %v74, 1.442695
    %v83 = vpow.pop %v82
    %v84 = vmul.f32 %v75, 1.442695
    %v85 = vpow.pop %v84
    %v86 = vmul.f32 %v76, 1.442695
    %v87 = vpow.pop %v86
    %v88 = vmul.f32 %v77, 1.442695
    %v89 = vpow.pop %v88
    %v90 = vmul.f32 %v78, 1.442695
    %v91 = vpow.pop %v90
    %v92 = vmul.f32 %v79, 1.442695
    %v93 = vpow.pop %v92
    %v94 = vmul.f32 %v80, 1.442695
    %v95 = vpow.pop %v94
    %v96 = vmul.f32 %v81, 1.442695
    %v97 = vpow.pop %v96
    %v98 = vadd.f32 %v83, 1.0
    %v99 = vadd.f32 %v85, 1.0
    %v100 = vadd.f32 %v87, 1.0
    %v101 = vadd.f32 %v89, 1.0
    %v102 = vadd.f32 %v91, 1.0
    %v103 = vadd.f32 %v93, 1.0
    %v104 = vadd.f32 %v95, 1.0
    %v105 = vadd.f32 %v97, 1.0
    %v106 = vrcp.pop %v98
    %v107 = vmul.f32 1.0, %v106
    %v108 = vrcp.pop %v99
    %v109 = vmul.f32 1.0, %v108
    %v110 = vrcp.pop %v100
    %v111 = vmul.f32 1.0, %v110
    %v112 = vrcp.pop %v101
    %v113 = vmul.f32 1.0, %v112
    %v114 = vrcp.pop %v102
    %v115 = vmul.f32 1.0, %v114
    %v116 = vrcp.pop %v103
    %v117 = vmul.f32 1.0, %v116
    %v118 = vrcp.pop %v104
    %v119 = vmul.f32 1.0, %v118
    %v120 = vrcp.pop %v105
    %v121 = vmul.f32 1.0, %v120
    %v122 = vld [vmem:[#allocation2] sm:$0xff]
    %v123 = vld [vmem:[#allocation2 + $0x8] sm:$0xff]
    %v124 = vld [vmem:[#allocation2 + $0x10] sm:$0xff]
    %v125 = vld [vmem:[#allocation2 + $0x18] sm:$0xff]
    %v126 = vld [vmem:[#allocation2 + $0x20] sm:$0xff]
    %v127 = vld [vmem:[#allocation2 + $0x28] sm:$0xff]
    %v128 = vld [vmem:[#allocation2 + $0x30] sm:$0xff]
    %v129 = vld [vmem:[#allocation2 + $0x38] sm:$0xff]
    %v130 = vmul.f32 %v122, %v107
    %v131 = vmul.f32 %v123, %v109
    %v132 = vmul.f32 %v124, %v111
    %v133 = vmul.f32 %v125, %v113
    %v134 = vmul.f32 %v126, %v115
    %v135 = vmul.f32 %v127, %v117
    %v136 = vmul.f32 %v128, %v119
    %v137 = vmul.f32 %v129, %v121
    %138 = vst [vmem:[#allocation8] sm:$0xff] %v130
    %139 = vst [vmem:[#allocation8 + $0x8] sm:$0xff] %v131
    %140 = vst [vmem:[#allocation8 + $0x10] sm:$0xff] %v132
    %141 = vst [vmem:[#allocation8 + $0x18] sm:$0xff] %v133
    %142 = vst [vmem:[#allocation8 + $0x20] sm:$0xff] %v134
    %143 = vst [vmem:[#allocation8 + $0x28] sm:$0xff] %v135
    %144 = vst [vmem:[#allocation8 + $0x30] sm:$0xff] %v136
    %145 = vst [vmem:[#allocation8 + $0x38] sm:$0xff] %v137
    // Predicated region
    $region26: #{tpu_custom_call.1} parent=1 // pred_check
      _
    $region27: #{tpu_custom_call.1} parent=1 // pred_check_branch
      %147 = sbr.rel (0) target = $region29
    $region28: #{tpu_custom_call.1} parent=1 // pred_region
      %s149 = ssub.s32 1024, 1024
      %150 = vsyncadd [#allocation4], %s149
      %s152 = sshll.u32 [#allocation8], 4
      %s153 = int_to_ptr.vmem [resolvable:$true] %s152
      %155 = dma.vmem_to_hbm [thread:$0]  %s153, 1024, %s3, [#allocation4]
    $region29: #{tpu_custom_call.1} parent=1 // pred_fallthru
      _
    // Predicated region
    $region30: #{tpu_custom_call.1} parent=1 // pred_check
      _
    $region31: #{tpu_custom_call.1} parent=1 // pred_check_branch
      %157 = sbr.rel (0) target = $region33
    $region32: #{tpu_custom_call.1} parent=1 // pred_region
      %158 = dma.done [#allocation4], 1024
    $region33: #{tpu_custom_call.1} parent=1 // pred_fallthru
      _
    %159 = vsyncpa [#allocation3], 1
    %160 = vsyncpa [#allocation6], 1
    %161 = vsyncpa [#allocation4], 1

</llo_original>
